<compile_context>
chip_gen: v7x
topology: tpu7x:2x2x1
jax: 0.10.0
libtpu: 0.0.40
codegen_flags: <defaults>
</compile_context>

<pallas_src>
import functools

import jax
import jax.numpy as jnp
from jax.experimental import pallas as pl
from jax.experimental.pallas import tpu as pltpu

LANE = 128


def _round_up(x, m):
    return ((x + m - 1) // m) * m


def _pad2d(a, rows, cols):
    r, c = a.shape
    return jnp.pad(a, ((0, rows - r), (0, cols - c)))


def _vmem_limit_bytes():
    """Generation-aware VMEM budget: ~36 MiB on 64 MiB/TC parts (v7x),
    ~96 MiB on 128 MiB parts (v5e/v6e). Conservative fallback if query fails."""
    try:
        cap = int(pltpu.get_tpu_info().vmem_capacity_bytes)
    except Exception:
        return 36 * 1024 * 1024
    if cap <= 64 * 1024 * 1024:
        return 36 * 1024 * 1024
    return 96 * 1024 * 1024


# ---------------------------------------------------------------------------
# Fused GCN layer kernels:  out = [relu]( A @ (X @ W) + b )
# ---------------------------------------------------------------------------
def _gcn_layer_kernel(a_ref, x_ref, w_ref, b_ref, o_ref, *, apply_relu):
    # Whole-K path: one row band of A per step, X/W resident, no reduction axis.
    xw = jnp.dot(x_ref[...], w_ref[...],
                 preferred_element_type=jnp.float32).astype(jnp.bfloat16)
    out = jnp.dot(a_ref[...], xw, preferred_element_type=jnp.float32) + b_ref[...]
    if apply_relu:
        out = jnp.maximum(out, 0.0)
    o_ref[...] = out.astype(o_ref.dtype)


def _gcn_layer_kernel_kacc(a_ref, x_ref, w_ref, b_ref, o_ref, acc_ref, *, apply_relu):
    # K-tiled path: (row, K) grid with K last; f32 VMEM accumulator.
    k = pl.program_id(1)

    @pl.when(k == 0)
    def _():
        acc_ref[...] = jnp.zeros_like(acc_ref)

    xw = jnp.dot(x_ref[...], w_ref[...],
                 preferred_element_type=jnp.float32).astype(jnp.bfloat16)
    acc_ref[...] += jnp.dot(a_ref[...], xw, preferred_element_type=jnp.float32)

    @pl.when(k == pl.num_programs(1) - 1)
    def _():
        out = acc_ref[...] + b_ref[...]
        if apply_relu:
            out = jnp.maximum(out, 0.0)
        o_ref[...] = out.astype(o_ref.dtype)


# ---------------------------------------------------------------------------
# Tile selection: largest tiles (multiples of 128 dividing n_pad) under budget.
# ---------------------------------------------------------------------------
def _choose_tiles(n_pad, cin_p, f, out_bytes, budget):
    slack = 1 << 20  # headroom for Mosaic-internal scratch

    def pick(total, cap):
        cap = min(cap - cap % 128, total)
        for cand in range(cap, 127, -128):
            if total % cand == 0:
                return cand
        return 128

    # Preferred: whole-K path (no reduction axis, no accumulator).
    tm_cap = n_pad
    while tm_cap >= 128:
        tm = pick(n_pad, tm_cap)
        need = (2 * tm * n_pad * 2          # A row band, double-buffered bf16
                + 2 * n_pad * cin_p * 2     # X (resident)
                + 2 * cin_p * f * 2         # W (resident)
                + 2 * tm * f * out_bytes    # output tile
                + slack)
        if need <= budget:
            return tm, n_pad
        tm_cap = tm - 128

    # Fallback: K-tiled reduction.
    tm = pick(n_pad, 512)
    tk_cap = 8192
    while tk_cap >= 128:
        tk = pick(n_pad, tk_cap)
        need = (2 * tm * tk * 2 + 2 * tk * cin_p * 2 + 2 * cin_p * f * 2
                + tm * f * 4 + 2 * tm * f * out_bytes + slack)
        if need <= budget:
            return tm, tk
        tk_cap = tk - 128
    return 128, 128


def gcn_layer(a_p, x_p, w_p, b_p, *, apply_relu, out_dtype, vmem_budget, vmem_limit):
    n_pad = a_p.shape[0]
    cin_p = x_p.shape[1]
    f = w_p.shape[1]
    out_bytes = jnp.dtype(out_dtype).itemsize
    tm, tk = _choose_tiles(n_pad, cin_p, f, out_bytes, vmem_budget)
    grid_rows = n_pad // tm

    cost = pl.CostEstimate(
        flops=2 * n_pad * n_pad * f + grid_rows * 2 * n_pad * cin_p * f,
        transcendentals=0,
        bytes_accessed=(n_pad * n_pad * 2
                        + (1 if tk == n_pad else grid_rows) * n_pad * cin_p * 2
                        + cin_p * f * 2 + n_pad * f * out_bytes + f * 4),
    )

    if tk == n_pad:
        # Single pass over all of K; X, W and bias stay VMEM-resident.
        return pl.pallas_call(
            functools.partial(_gcn_layer_kernel, apply_relu=apply_relu),
            out_shape=jax.ShapeDtypeStruct((n_pad, f), out_dtype),
            grid_spec=pltpu.PrefetchScalarGridSpec(
                num_scalar_prefetch=0,
                grid=(grid_rows,),
                in_specs=[
                    pl.BlockSpec((tm, n_pad), lambda i: (i, 0)),     # A row band
                    pl.BlockSpec((n_pad, cin_p), lambda i: (0, 0)),  # X (resident)
                    pl.BlockSpec((cin_p, f), lambda i: (0, 0)),      # W (resident)
                    pl.BlockSpec((1, f), lambda i: (0, 0)),          # bias
                ],
                out_specs=pl.BlockSpec((tm, f), lambda i: (i, 0)),
            ),
            compiler_params=pltpu.CompilerParams(
                dimension_semantics=("parallel",),
                vmem_limit_bytes=vmem_limit,
            ),
            cost_estimate=cost,
        )(a_p, x_p, w_p, b_p)

    # K-tiled fallback for graphs whose row bands do not fit VMEM.
    grid = (grid_rows, n_pad // tk)
    return pl.pallas_call(
        functools.partial(_gcn_layer_kernel_kacc, apply_relu=apply_relu),
        out_shape=jax.ShapeDtypeStruct((n_pad, f), out_dtype),
        grid_spec=pltpu.PrefetchScalarGridSpec(
            num_scalar_prefetch=0,
            grid=grid,
            in_specs=[
                pl.BlockSpec((tm, tk), lambda i, k: (i, k)),     # A tile
                pl.BlockSpec((tk, cin_p), lambda i, k: (k, 0)),  # X K-band
                pl.BlockSpec((cin_p, f), lambda i, k: (0, 0)),   # W (resident)
                pl.BlockSpec((1, f), lambda i, k: (0, 0)),       # bias
            ],
            out_specs=pl.BlockSpec((tm, f), lambda i, k: (i, 0)),
            scratch_shapes=[pltpu.VMEM((tm, f), jnp.float32)],
        ),
        compiler_params=pltpu.CompilerParams(
            dimension_semantics=("parallel", "arbitrary"),
            vmem_limit_bytes=vmem_limit,
        ),
        cost_estimate=cost,
    )(a_p, x_p, w_p, b_p)


# ---------------------------------------------------------------------------
# Forward wrapper: two fused layers; a_hat_p is a pre-padded bf16 adjacency.
# ---------------------------------------------------------------------------
def gcn_forward_pallas(a_hat_p, x, w1, b1, w2, b2, *, vmem_budget_bytes=None):
    n_pad = a_hat_p.shape[0]
    n, cin = x.shape
    hid = w1.shape[1]
    out_c = w2.shape[1]
    assert n <= n_pad and n_pad % LANE == 0

    vmem_limit = _vmem_limit_bytes()
    budget = vmem_limit if vmem_budget_bytes is None else int(vmem_budget_bytes)

    cin_p = _round_up(cin, LANE)
    hid_p = _round_up(hid, LANE)
    out_p = _round_up(out_c, LANE)

    bf = jnp.bfloat16
    x_p = _pad2d(x.astype(jnp.float32), n_pad, cin_p).astype(bf)
    w1_p = _pad2d(w1, cin_p, hid_p).astype(bf)
    w2_p = _pad2d(w2, hid_p, out_p).astype(bf)
    b1_p = _pad2d(b1.reshape(1, -1), 1, hid_p).astype(jnp.float32)
    b2_p = _pad2d(b2.reshape(1, -1), 1, out_p).astype(jnp.float32)

    # Layer 1: h = relu(A_hat @ (X @ W1) + b1)
    h = gcn_layer(a_hat_p, x_p, w1_p, b1_p, apply_relu=True,
                  out_dtype=bf, vmem_budget=budget, vmem_limit=vmem_limit)
    # Layer 2: out = A_hat @ (h @ W2) + b2
    out = gcn_layer(a_hat_p, h, w2_p, b2_p, apply_relu=False,
                    out_dtype=jnp.float32, vmem_budget=budget, vmem_limit=vmem_limit)
    return out[:n, :out_c]


# ---------------------------------------------------------------------------
# Plain-JAX glue: dense normalized adjacency, built directly zero-padded in bf16.
# PyG semantics: duplicate edges accumulate, self-loops added only where missing,
# symmetric D^{-1/2}(A+I)D^{-1/2} normalization. Padded rows/cols stay zero.
# ---------------------------------------------------------------------------
def build_normalized_adjacency(edge_index, num_nodes, n_pad, dtype=jnp.bfloat16):
    # TODO(synk): sparse scatter-based message passing has no clean Pallas
    # equivalent; adjacency densification stays in plain-JAX glue.
    src = edge_index[0]                          # message source j
    dst = edge_index[1]                          # message target i
    a = jnp.zeros((n_pad, n_pad), jnp.float32)
    a = a.at[dst, src].add(1.0)                  # duplicates accumulate (PyG scatter)
    idx = jnp.arange(n_pad)
    diag = a[idx, idx]
    need_loop = (diag == 0.0) & (idx < num_nodes)
    a = a.at[idx, idx].add(need_loop.astype(jnp.float32))
    deg = jnp.sum(a, axis=1)
    dinv = jnp.where(deg > 0, jax.lax.rsqrt(deg), 0.0)
    return (dinv[:, None] * a * dinv[None, :]).astype(dtype)


# ---------------------------------------------------------------------------
# Reference with matching bf16 rounding (f32 accumulation) for correctness check.
# ---------------------------------------------------------------------------
def gcn_forward_ref(a_hat_bf, x, w1, b1, w2, b2):
    bf, f32 = jnp.bfloat16, jnp.float32
    a = a_hat_bf.astype(bf)
    xw1 = jnp.dot(x.astype(bf), w1.astype(bf), preferred_element_type=f32).astype(bf)
    h = jnp.maximum(jnp.dot(a, xw1, preferred_element_type=f32) + b1, 0.0).astype(bf)
    hw2 = jnp.dot(h, w2.astype(bf), preferred_element_type=f32).astype(bf)
    return jnp.dot(a, hw2, preferred_element_type=f32) + b2


if __name__ == "__main__":
    key = jax.random.PRNGKey(0)

    def run_case(case_key, num_nodes, num_edges, cin, hid, cout, vmem_budget=None):
        k_x, k_e, k_w1, k_b1, k_w2, k_b2 = jax.random.split(case_key, 6)
        x = jax.random.normal(k_x, (num_nodes, cin), jnp.float32)
        edge_index = jax.random.randint(k_e, (2, num_edges), 0, num_nodes, jnp.int32)

        def glorot(k, fi, fo):
            lim = jnp.sqrt(6.0 / (fi + fo))
            return jax.random.uniform(k, (fi, fo), jnp.float32, -lim, lim)

        w1 = glorot(k_w1, cin, hid)
        b1 = 0.01 * jax.random.normal(k_b1, (1, hid), jnp.float32)
        w2 = glorot(k_w2, hid, cout)
        b2 = 0.01 * jax.random.normal(k_b2, (1, cout), jnp.float32)

        n_pad = _round_up(num_nodes, LANE)
        a_hat_p = build_normalized_adjacency(edge_index, num_nodes, n_pad)

        out = jax.block_until_ready(
            gcn_forward_pallas(a_hat_p, x, w1, b1, w2, b2,
                               vmem_budget_bytes=vmem_budget))
        ref = gcn_forward_ref(a_hat_p[:num_nodes, :num_nodes], x, w1, b1, w2, b2)
        assert out.shape == (num_nodes, cout)
        assert jnp.allclose(out, ref, atol=3e-2, rtol=3e-2), (
            f"Pallas output mismatch (N={num_nodes}, budget={vmem_budget})"
        )

    k1, k2, k3 = jax.random.split(key, 3)
    # Module-consistent small shapes: 16 nodes, 48 edges, 8 -> 32 -> 16.
    run_case(k1, num_nodes=16, num_edges=48, cin=8, hid=32, cout=16)
    # Larger case: exercises the whole-K single-pass path (n_pad = 640).
    run_case(k2, num_nodes=600, num_edges=3000, cin=8, hid=32, cout=16)
    # Artificially tiny tile budget: forces the K-tiled accumulator fallback path.
    run_case(k3, num_nodes=600, num_edges=3000, cin=8, hid=32, cout=16,
             vmem_budget=1_500_000)

    print("KERNEL_OK")
</pallas_src>

<mosaic_0001>
module attributes {stable_mosaic.version = 11 : i64} {
  func.func @_gcn_layer_kernel(%arg0: i32, %arg1: memref<128x128xbf16, #tpu.memory_space<vmem>>, %arg2: memref<128x128xbf16, #tpu.memory_space<vmem>>, %arg3: memref<128x128xbf16, #tpu.memory_space<vmem>>, %arg4: memref<1x128xf32, #tpu.memory_space<vmem>>, %arg5: memref<128x128xbf16, #tpu.memory_space<vmem>>) attributes {dimension_semantics = [#tpu.dimension_semantics<parallel>], iteration_bounds = array<i64: 1>, scalar_prefetch = 0 : i64, scratch_operands = 0 : i64, tpu.core_type = #tpu.core_type<tc>, window_params = [{transform_indices = @transform_0, window_bounds = array<i64: 128, 128>}, {pipeline_mode = #tpu.pipeline_mode<synchronous>, transform_indices = @transform_1, window_bounds = array<i64: 128, 128>}, {pipeline_mode = #tpu.pipeline_mode<synchronous>, transform_indices = @transform_2, window_bounds = array<i64: 128, 128>}, {pipeline_mode = #tpu.pipeline_mode<synchronous>, transform_indices = @transform_3, window_bounds = array<i64: 1, 128>}, {transform_indices = @transform_4, window_bounds = array<i64: 128, 128>}]} {
    %c0 = arith.constant 0 : index
    %c0_0 = arith.constant 0 : index
    %0 = vector.load %arg2[%c0, %c0_0] : memref<128x128xbf16, #tpu.memory_space<vmem>>, vector<128x128xbf16>
    %c0_1 = arith.constant 0 : index
    %c0_2 = arith.constant 0 : index
    %1 = vector.load %arg3[%c0_1, %c0_2] : memref<128x128xbf16, #tpu.memory_space<vmem>>, vector<128x128xbf16>
    %cst = arith.constant dense<0.000000e+00> : vector<128x128xf32>
    %2 = tpu.matmul %0, %1, %cst {dimension_numbers = #tpu.dot_dimension_numbers<[1], [0], [0], [1], [0, 0, 1, 1], [], []>} : vector<128x128xbf16>, vector<128x128xbf16>, vector<128x128xf32> -> vector<128x128xf32>
    %3 = arith.truncf %2 : vector<128x128xf32> to vector<128x128xbf16>
    %c0_3 = arith.constant 0 : index
    %c0_4 = arith.constant 0 : index
    %4 = vector.load %arg1[%c0_3, %c0_4] : memref<128x128xbf16, #tpu.memory_space<vmem>>, vector<128x128xbf16>
    %cst_5 = arith.constant dense<0.000000e+00> : vector<128x128xf32>
    %5 = tpu.matmul %4, %3, %cst_5 {dimension_numbers = #tpu.dot_dimension_numbers<[1], [0], [0], [1], [0, 0, 1, 1], [], []>} : vector<128x128xbf16>, vector<128x128xbf16>, vector<128x128xf32> -> vector<128x128xf32>
    %c0_6 = arith.constant 0 : index
    %c0_7 = arith.constant 0 : index
    %6 = vector.load %arg4[%c0_6, %c0_7] : memref<1x128xf32, #tpu.memory_space<vmem>>, vector<1x128xf32>
    %7 = vector.broadcast %6 : vector<1x128xf32> to vector<128x128xf32>
    %8 = arith.addf %5, %7 : vector<128x128xf32>
    %cst_8 = arith.constant 0.000000e+00 : f32
    %9 = vector.broadcast %cst_8 : f32 to vector<128x128xf32>
    %10 = arith.maximumf %8, %9 : vector<128x128xf32>
    %11 = arith.truncf %10 : vector<128x128xf32> to vector<128x128xbf16>
    %c0_9 = arith.constant 0 : index
    %c0_10 = arith.constant 0 : index
    %12 = vector.load %arg5[%c0_9, %c0_10] : memref<128x128xbf16, #tpu.memory_space<vmem>>, vector<128x128xbf16>
    tpu.vector_store %arg5[%c0_9, %c0_10], %11 {strides = array<i32>} : memref<128x128xbf16, #tpu.memory_space<vmem>>, vector<128x128xbf16>,
    return
  }
  func.func @transform_0(%arg0: i32) -> (i32, i32) {
    %c0_i32 = arith.constant 0 : i32
    %c0_i32_0 = arith.constant 0 : i32
    return %arg0, %c0_i32 : i32, i32
  }
  func.func @transform_1(%arg0: i32) -> (i32, i32) {
    %c0_i32 = arith.constant 0 : i32
    %c0_i32_0 = arith.constant 0 : i32
    %c0_i32_1 = arith.constant 0 : i32
    return %c0_i32, %c0_i32_0 : i32, i32
  }
  func.func @transform_2(%arg0: i32) -> (i32, i32) {
    %c0_i32 = arith.constant 0 : i32
    %c0_i32_0 = arith.constant 0 : i32
    %c0_i32_1 = arith.constant 0 : i32
    return %c0_i32, %c0_i32_0 : i32, i32
  }
  func.func @transform_3(%arg0: i32) -> (i32, i32) {
    %c0_i32 = arith.constant 0 : i32
    %c0_i32_0 = arith.constant 0 : i32
    %c0_i32_1 = arith.constant 0 : i32
    return %c0_i32, %c0_i32_0 : i32, i32
  }
  func.func @transform_4(%arg0: i32) -> (i32, i32) {
    %c0_i32 = arith.constant 0 : i32
    %c0_i32_0 = arith.constant 0 : i32
    return %arg0, %c0_i32 : i32, i32
  }
}

</mosaic_0001>

<llo_original>
// kernel: tpu_custom_call.1
$region0: #{tpu_custom_call.1}
  #allocation0 [shape = 'u32[]', space=smem, size = 0x4, offset = 0x4, fixed_abs, tag = 'smem constant byte address 0x4 - core index']
  #allocation1 [shape = 'u32[144,128]{1,0:T(1,128)}', space=vmem, size = 0x12000, scoped, tag = 'internal scratch']
  %s0 = inlined_call_operand.hbm [shape: bf16[128,128], index: 0, kind: input, shape index: {}]
  %s1 = inlined_call_operand.hbm [shape: bf16[128,128], index: 1, kind: input, shape index: {}]
  %s2 = inlined_call_operand.hbm [shape: bf16[128,128], index: 2, kind: input, shape index: {}]
  %s3 = inlined_call_operand.vmem [shape: f32[1,128], index: 3, kind: input, shape index: {}]
  %s4 = inlined_call_operand.hbm [shape: bf16[128,128], index: 4, kind: output, shape index: {}]
  %s5 = sld [smem:[#allocation0]]
  $region38: #{tpu_custom_call.1} parent=0
    _
  %s7 = ssub.s32 1, %s5
  %s8 = scalar_select 0, %s7, %s5
  $region1: #{tpu_custom_call.1} parent=0
    #allocation2 [shape = 'u8[32768]{0}', space=vmem, size = 0x8000, scoped, tag = 'input window, operand 0, single buffered']
    #allocation3 [shape = 's32[1]{0}', space=sflag, size = 0x4, scoped, tag = 'scoped memory for tpu_custom_call.1']
    #allocation4 [shape = 's32[1]{0}', space=sflag, size = 0x4, scoped, tag = 'scoped memory for tpu_custom_call.1']
    #allocation5 [shape = 'u8[32768]{0}', space=vmem, size = 0x8000, scoped, tag = 'input window, operand 1, single buffered']
    #allocation6 [shape = 's32[1]{0}', space=sflag, size = 0x4, scoped, tag = 'scoped memory for tpu_custom_call.1']
    #allocation7 [shape = 'u8[32768]{0}', space=vmem, size = 0x8000, scoped, tag = 'input window, operand 2, single buffered']
    #allocation8 [shape = 'u8[32768]{0}', space=vmem, size = 0x8000, scoped, tag = 'output window, operand 0, single buffered']
    %9 = vsyncpa [#allocation3], 0
    %10 = vsyncpa [#allocation6], 0
    %11 = vsyncpa [#allocation4], 0
    // Predicated region
    $region2: #{tpu_custom_call.1} parent=1 // pred_check
      _
    $region3: #{tpu_custom_call.1} parent=1 // pred_check_branch
      %13 = sbr.rel (0) target = $region5
    $region4: #{tpu_custom_call.1} parent=1 // pred_region
      %s15 = ssub.s32 1024, 1024
      %16 = vsyncadd [#allocation3], %s15
      %s17 = sshll.u32 [#allocation2], 4
      %s18 = int_to_ptr.vmem [resolvable:$true] %s17
      %23 = dma.hbm_to_vmem [thread:$0]  %s0, 1024, %s18, [#allocation3], 64, 64, 4
    $region5: #{tpu_custom_call.1} parent=1 // pred_fallthru
      _
    // Predicated region
    $region6: #{tpu_custom_call.1} parent=1 // pred_check
      _
    $region7: #{tpu_custom_call.1} parent=1 // pred_check_branch
      %25 = sbr.rel (0) target = $region9
    $region8: #{tpu_custom_call.1} parent=1 // pred_region
      %s27 = ssub.s32 1024, 1024
      %28 = vsyncadd [#allocation6], %s27
      %s29 = sshll.u32 [#allocation5], 4
      %s30 = int_to_ptr.vmem [resolvable:$true] %s29
      %35 = dma.hbm_to_vmem [thread:$0]  %s1, 1024, %s30, [#allocation6], 64, 64, 4
    $region9: #{tpu_custom_call.1} parent=1 // pred_fallthru
      _
    // Predicated region
    $region10: #{tpu_custom_call.1} parent=1 // pred_check
      _
    $region11: #{tpu_custom_call.1} parent=1 // pred_check_branch
      %37 = sbr.rel (0) target = $region13
    $region12: #{tpu_custom_call.1} parent=1 // pred_region
      %s39 = ssub.s32 1024, 1024
      %40 = vsyncadd [#allocation6], %s39
      %s41 = sshll.u32 [#allocation7], 4
      %s42 = int_to_ptr.vmem [resolvable:$true] %s41
      %47 = dma.hbm_to_vmem [thread:$0]  %s2, 1024, %s42, [#allocation6], 64, 64, 4
    $region13: #{tpu_custom_call.1} parent=1 // pred_fallthru
      _
    // Predicated region
    $region14: #{tpu_custom_call.1} parent=1 // pred_check
      _
    $region15: #{tpu_custom_call.1} parent=1 // pred_check_branch
      %49 = sbr.rel (0) target = $region17
    $region16: #{tpu_custom_call.1} parent=1 // pred_region
      _
    $region17: #{tpu_custom_call.1} parent=1 // pred_fallthru
      _
    // Predicated region
    $region18: #{tpu_custom_call.1} parent=1 // pred_check
      _
    $region19: #{tpu_custom_call.1} parent=1 // pred_check_branch
      %51 = sbr.rel (0) target = $region21
    $region20: #{tpu_custom_call.1} parent=1 // pred_region
      %52 = dma.done [#allocation3], 1024
    $region21: #{tpu_custom_call.1} parent=1 // pred_fallthru
      _
    // Predicated region
    $region22: #{tpu_custom_call.1} parent=1 // pred_check
      _
    $region23: #{tpu_custom_call.1} parent=1 // pred_check_branch
      %54 = sbr.rel (0) target = $region25
    $region24: #{tpu_custom_call.1} parent=1 // pred_region
      %55 = dma.done [#allocation6], 1024
    $region25: #{tpu_custom_call.1} parent=1 // pred_fallthru
      _
    // Predicated region
    $region26: #{tpu_custom_call.1} parent=1 // pred_check
      _
    $region27: #{tpu_custom_call.1} parent=1 // pred_check_branch
      %57 = sbr.rel (0) target = $region29
    $region28: #{tpu_custom_call.1} parent=1 // pred_region
      %58 = dma.done [#allocation6], 1024
    $region29: #{tpu_custom_call.1} parent=1 // pred_fallthru
      _
    %v60 = vld [vmem:[#allocation5] sm:$0xf]
    %v61 = vld [vmem:[#allocation5 + $0x4] sm:$0xf]
    %v62 = vld [vmem:[#allocation5 + $0x8] sm:$0xf]
    %v63 = vld [vmem:[#allocation5 + $0xc] sm:$0xf]
    %v64 = vld [vmem:[#allocation5 + $0x10] sm:$0xf]
    %v65 = vld [vmem:[#allocation5 + $0x14] sm:$0xf]
    %v66 = vld [vmem:[#allocation5 + $0x18] sm:$0xf]
    %v67 = vld [vmem:[#allocation5 + $0x1c] sm:$0xf]
    %v68 = vld [vmem:[#allocation5 + $0x20] sm:$0xf]
    %v69 = vld [vmem:[#allocation5 + $0x24] sm:$0xf]
    %v70 = vld [vmem:[#allocation5 + $0x28] sm:$0xf]
    %v71 = vld [vmem:[#allocation5 + $0x2c] sm:$0xf]
    %v72 = vld [vmem:[#allocation5 + $0x30] sm:$0xf]
    %v73 = vld [vmem:[#allocation5 + $0x34] sm:$0xf]
    %v74 = vld [vmem:[#allocation5 + $0x38] sm:$0xf]
    %v75 = vld [vmem:[#allocation5 + $0x3c] sm:$0xf]
    %v76 = vld [vmem:[#allocation7] sm:$0xf]
    %v77 = vld [vmem:[#allocation7 + $0x4] sm:$0xf]
    %v78 = vld [vmem:[#allocation7 + $0x8] sm:$0xf]
    %v79 = vld [vmem:[#allocation7 + $0xc] sm:$0xf]
    %v80 = vld [vmem:[#allocation7 + $0x10] sm:$0xf]
    %v81 = vld [vmem:[#allocation7 + $0x14] sm:$0xf]
    %v82 = vld [vmem:[#allocation7 + $0x18] sm:$0xf]
    %v83 = vld [vmem:[#allocation7 + $0x1c] sm:$0xf]
    %v84 = vld [vmem:[#allocation7 + $0x20] sm:$0xf]
    %v85 = vld [vmem:[#allocation7 + $0x24] sm:$0xf]
    %v86 = vld [vmem:[#allocation7 + $0x28] sm:$0xf]
    %v87 = vld [vmem:[#allocation7 + $0x2c] sm:$0xf]
    %v88 = vld [vmem:[#allocation7 + $0x30] sm:$0xf]
    %v89 = vld [vmem:[#allocation7 + $0x34] sm:$0xf]
    %v90 = vld [vmem:[#allocation7 + $0x38] sm:$0xf]
    %v91 = vld [vmem:[#allocation7 + $0x3c] sm:$0xf]
    %v108 = vunpack.c.l.b16 %v60
    %v109 = vunpack.c.l.b16 %v61
    %v110 = vunpack.c.l.b16 %v62
    %v111 = vunpack.c.l.b16 %v63
    %v112 = vunpack.c.l.b16 %v64
    %v113 = vunpack.c.l.b16 %v65
    %v114 = vunpack.c.l.b16 %v66
    %v115 = vunpack.c.l.b16 %v67
    %v116 = vunpack.c.l.b16 %v68
    %v117 = vunpack.c.l.b16 %v69
    %v118 = vunpack.c.l.b16 %v70
    %v119 = vunpack.c.l.b16 %v71
    %v120 = vunpack.c.l.b16 %v72
    %v121 = vunpack.c.l.b16 %v73
    %v122 = vunpack.c.l.b16 %v74
    %v123 = vunpack.c.l.b16 %v75
    %v124 = vpack.c.b16 %v109, %v108
    %v125 = vpack.c.b16 %v111, %v110
    %v126 = vpack.c.b16 %v113, %v112
    %v127 = vpack.c.b16 %v115, %v114
    %v128 = vpack.c.b16 %v117, %v116
    %v129 = vpack.c.b16 %v119, %v118
    %v130 = vpack.c.b16 %v121, %v120
    %v131 = vpack.c.b16 %v123, %v122
    %v156 = vunpack.c.l.b16 %v76
    %v157 = vunpack.c.l.b16 %v77
    %v158 = vunpack.c.l.b16 %v78
    %v159 = vunpack.c.l.b16 %v79
    %v160 = vunpack.c.l.b16 %v80
    %v161 = vunpack.c.l.b16 %v81
    %v162 = vunpack.c.l.b16 %v82
    %v163 = vunpack.c.l.b16 %v83
    %v164 = vunpack.c.l.b16 %v84
    %v165 = vunpack.c.l.b16 %v85
    %v166 = vunpack.c.l.b16 %v86
    %v167 = vunpack.c.l.b16 %v87
    %v168 = vunpack.c.l.b16 %v88
    %v169 = vunpack.c.l.b16 %v89
    %v170 = vunpack.c.l.b16 %v90
    %v171 = vunpack.c.l.b16 %v91
    %v172 = vpack.c.b16 %v157, %v156
    %v173 = vpack.c.b16 %v159, %v158
    %v174 = vpack.c.b16 %v161, %v160
    %v175 = vpack.c.b16 %v163, %v162
    %v176 = vpack.c.b16 %v165, %v164
    %v177 = vpack.c.b16 %v167, %v166
    %v178 = vpack.c.b16 %v169, %v168
    %v179 = vpack.c.b16 %v171, %v170
    %188 = vmatprep.subr.bf16.mxu0 0
    %189 = vmatpush1.bf16.msra.mxu0 %v172
    %190 = vmatprep.subr.bf16.mxu0 0
    %191 = vmatpush1.bf16.msra.mxu0 %v173
    %192 = vmatprep.subr.bf16.mxu0 0
    %193 = vmatpush1.bf16.msra.mxu0 %v174
    %194 = vmatprep.subr.bf16.mxu0 0
    %195 = vmatpush1.bf16.msra.mxu0 %v175
    %196 = vmatprep.subr.bf16.mxu0 0
    %197 = vmatpush1.bf16.msra.mxu0 %v176
    %198 = vmatprep.subr.bf16.mxu0 0
    %199 = vmatpush1.bf16.msra.mxu0 %v177
    %200 = vmatprep.subr.bf16.mxu0 0
    %201 = vmatpush1.bf16.msra.mxu0 %v178
    %202 = vmatprep.subr.bf16.mxu0 0
    %203 = vmatpush1.bf16.msra.mxu0 %v179
    %204 = vmatprep.subr.bf16.mxu0 0
    %205 = vmatpush1.bf16.msra.mxu0 0
    %206 = vmatprep.subr.bf16.mxu0 0
    %207 = vmatpush1.bf16.msra.mxu0 0
    %208 = vmatprep.subr.bf16.mxu0 0
    %209 = vmatpush1.bf16.msra.mxu0 0
    %210 = vmatprep.subr.bf16.mxu0 0
    %211 = vmatpush1.bf16.msra.mxu0 0
    %212 = vmatprep.subr.bf16.mxu0 0
    %213 = vmatpush1.bf16.msra.mxu0 0
    %214 = vmatprep.subr.bf16.mxu0 0
    %215 = vmatpush1.bf16.msra.mxu0 0
    %216 = vmatprep.subr.bf16.mxu0 0
    %217 = vmatpush1.bf16.msra.mxu0 0
    %218 = vmatprep.subr.bf16.mxu0 0
    %219 = vmatpush1.bf16.msra.mxu0 0
    %220 = vmatprep.mubr.bf16.mxu0 0
    %221 = vmatmul.mubr.bf16.gmra.mrb[0].mxu0 %v124
    %v222 = vpop.f32.mrb[0].mxu0
    %v223 = vadd.f32 0.0, %v222
    %v224 = vpop.f32.mrb[0].mxu0
    %v225 = vpop.f32.mrb[0].mxu0
    %v226 = vadd.f32 0.0, %v225
    %v227 = vpop.f32.mrb[0].mxu0
    %228 = vmatprep.mubr.bf16.mxu0 0
    %229 = vmatmul.mubr.bf16.gmra.mrb[0].mxu0 %v125
    %v230 = vpop.f32.mrb[0].mxu0
    %v231 = vadd.f32 0.0, %v230
    %v232 = vpop.f32.mrb[0].mxu0
    %v233 = vpop.f32.mrb[0].mxu0
    %v234 = vadd.f32 0.0, %v233
    %v235 = vpop.f32.mrb[0].mxu0
    %236 = vmatprep.mubr.bf16.mxu0 0
    %237 = vmatmul.mubr.bf16.gmra.mrb[0].mxu0 %v126
    %v238 = vpop.f32.mrb[0].mxu0
    %v239 = vadd.f32 0.0, %v238
    %v240 = vpop.f32.mrb[0].mxu0
    %v241 = vpop.f32.mrb[0].mxu0
    %v242 = vadd.f32 0.0, %v241
    %v243 = vpop.f32.mrb[0].mxu0
    %244 = vmatprep.mubr.bf16.mxu0 0
    %245 = vmatmul.mubr.bf16.gmra.mrb[0].mxu0 %v127
    %v246 = vpop.f32.mrb[0].mxu0
    %v247 = vadd.f32 0.0, %v246
    %v248 = vpop.f32.mrb[0].mxu0
    %v249 = vpop.f32.mrb[0].mxu0
    %v250 = vadd.f32 0.0, %v249
    %v251 = vpop.f32.mrb[0].mxu0
    %252 = vmatprep.mubr.bf16.mxu0 0
    %253 = vmatmul.mubr.bf16.gmra.mrb[0].mxu0 %v128
    %v254 = vpop.f32.mrb[0].mxu0
    %v255 = vadd.f32 0.0, %v254
    %v256 = vpop.f32.mrb[0].mxu0
    %v257 = vpop.f32.mrb[0].mxu0
    %v258 = vadd.f32 0.0, %v257
    %v259 = vpop.f32.mrb[0].mxu0
    %260 = vmatprep.mubr.bf16.mxu0 0
    %261 = vmatmul.mubr.bf16.gmra.mrb[0].mxu0 %v129
    %v262 = vpop.f32.mrb[0].mxu0
    %v263 = vadd.f32 0.0, %v262
    %v264 = vpop.f32.mrb[0].mxu0
    %v265 = vpop.f32.mrb[0].mxu0
    %v266 = vadd.f32 0.0, %v265
    %v267 = vpop.f32.mrb[0].mxu0
    %268 = vmatprep.mubr.bf16.mxu0 0
    %269 = vmatmul.mubr.bf16.gmra.mrb[0].mxu0 %v130
    %v270 = vpop.f32.mrb[0].mxu0
    %v271 = vadd.f32 0.0, %v270
    %v272 = vpop.f32.mrb[0].mxu0
    %v273 = vpop.f32.mrb[0].mxu0
    %v274 = vadd.f32 0.0, %v273
    %v275 = vpop.f32.mrb[0].mxu0
    %276 = vmatprep.mubr.bf16.mxu0 0
    %277 = vmatmul.mubr.bf16.gmra.mrb[0].mxu0 %v131
    %v278 = vpop.f32.mrb[0].mxu0
    %v279 = vadd.f32 0.0, %v278
    %v280 = vpop.f32.mrb[0].mxu0
    %v281 = vpop.f32.mrb[0].mxu0
    %v282 = vadd.f32 0.0, %v281
    %v283 = vpop.f32.mrb[0].mxu0
    %284 = vdwg.mxu0
    %v285 = vpack.c.bf16 %v226, %v223
    %v286 = vpack.c.bf16 %v234, %v231
    %v287 = vpack.c.bf16 %v242, %v239
    %v288 = vpack.c.bf16 %v250, %v247
    %v289 = vpack.c.bf16 %v258, %v255
    %v290 = vpack.c.bf16 %v266, %v263
    %v291 = vpack.c.bf16 %v274, %v271
    %v292 = vpack.c.bf16 %v282, %v279
    %v293 = vld [vmem:[#allocation2] sm:$0xf]
    %v294 = vld [vmem:[#allocation2 + $0x4] sm:$0xf]
    %v295 = vld [vmem:[#allocation2 + $0x8] sm:$0xf]
    %v296 = vld [vmem:[#allocation2 + $0xc] sm:$0xf]
    %v297 = vld [vmem:[#allocation2 + $0x10] sm:$0xf]
    %v298 = vld [vmem:[#allocation2 + $0x14] sm:$0xf]
    %v299 = vld [vmem:[#allocation2 + $0x18] sm:$0xf]
    %v300 = vld [vmem:[#allocation2 + $0x1c] sm:$0xf]
    %v301 = vld [vmem:[#allocation2 + $0x20] sm:$0xf]
    %v302 = vld [vmem:[#allocation2 + $0x24] sm:$0xf]
    %v303 = vld [vmem:[#allocation2 + $0x28] sm:$0xf]
    %v304 = vld [vmem:[#allocation2 + $0x2c] sm:$0xf]
    %v305 = vld [vmem:[#allocation2 + $0x30] sm:$0xf]
    %v306 = vld [vmem:[#allocation2 + $0x34] sm:$0xf]
    %v307 = vld [vmem:[#allocation2 + $0x38] sm:$0xf]
    %v308 = vld [vmem:[#allocation2 + $0x3c] sm:$0xf]
    %v309 = vld [vmem:[%s3] sm:$0x1]
    %v311 = vlaneseq
    %v312 = vshrl.u32 %v311, 7
    %v313 = vsub.s32 0, %v312
    %v314 = vrot.slane %v309, %v313
    %v332 = vunpack.c.l.b16 %v293
    %v333 = vunpack.c.l.b16 %v294
    %v334 = vunpack.c.l.b16 %v295
    %v335 = vunpack.c.l.b16 %v296
    %v336 = vunpack.c.l.b16 %v297
    %v337 = vunpack.c.l.b16 %v298
    %v338 = vunpack.c.l.b16 %v299
    %v339 = vunpack.c.l.b16 %v300
    %v340 = vunpack.c.l.b16 %v301
    %v341 = vunpack.c.l.b16 %v302
    %v342 = vunpack.c.l.b16 %v303
    %v343 = vunpack.c.l.b16 %v304
    %v344 = vunpack.c.l.b16 %v305
    %v345 = vunpack.c.l.b16 %v306
    %v346 = vunpack.c.l.b16 %v307
    %v347 = vunpack.c.l.b16 %v308
    %v348 = vpack.c.b16 %v333, %v332
    %v349 = vpack.c.b16 %v335, %v334
    %v350 = vpack.c.b16 %v337, %v336
    %v351 = vpack.c.b16 %v339, %v338
    %v352 = vpack.c.b16 %v341, %v340
    %v353 = vpack.c.b16 %v343, %v342
    %v354 = vpack.c.b16 %v345, %v344
    %v355 = vpack.c.b16 %v347, %v346
    %364 = vmatprep.subr.bf16.mxu0 0
    %365 = vmatpush1.bf16.msra.mxu0 %v285
    %366 = vmatprep.subr.bf16.mxu0 0
    %367 = vmatpush1.bf16.msra.mxu0 %v286
    %368 = vmatprep.subr.bf16.mxu0 0
    %369 = vmatpush1.bf16.msra.mxu0 %v287
    %370 = vmatprep.subr.bf16.mxu0 0
    %371 = vmatpush1.bf16.msra.mxu0 %v288
    %372 = vmatprep.subr.bf16.mxu0 0
    %373 = vmatpush1.bf16.msra.mxu0 %v289
    %374 = vmatprep.subr.bf16.mxu0 0
    %375 = vmatpush1.bf16.msra.mxu0 %v290
    %376 = vmatprep.subr.bf16.mxu0 0
    %377 = vmatpush1.bf16.msra.mxu0 %v291
    %378 = vmatprep.subr.bf16.mxu0 0
    %379 = vmatpush1.bf16.msra.mxu0 %v292
    %380 = vmatprep.subr.bf16.mxu0 0
    %381 = vmatpush1.bf16.msra.mxu0 0
    %382 = vmatprep.subr.bf16.mxu0 0
    %383 = vmatpush1.bf16.msra.mxu0 0
    %384 = vmatprep.subr.bf16.mxu0 0
    %385 = vmatpush1.bf16.msra.mxu0 0
    %386 = vmatprep.subr.bf16.mxu0 0
    %387 = vmatpush1.bf16.msra.mxu0 0
    %388 = vmatprep.subr.bf16.mxu0 0
    %389 = vmatpush1.bf16.msra.mxu0 0
    %390 = vmatprep.subr.bf16.mxu0 0
    %391 = vmatpush1.bf16.msra.mxu0 0
    %392 = vmatprep.subr.bf16.mxu0 0
    %393 = vmatpush1.bf16.msra.mxu0 0
    %394 = vmatprep.subr.bf16.mxu0 0
    %395 = vmatpush1.bf16.msra.mxu0 0
    %396 = vmatprep.mubr.bf16.mxu0 0
    %397 = vmatmul.mubr.bf16.gmra.mrb[0].mxu0 %v348
    %v398 = vpop.f32.mrb[0].mxu0
    %v399 = vadd.f32 %v314, %v398
    %v400 = vpop.f32.mrb[0].mxu0
    %v401 = vpop.f32.mrb[0].mxu0
    %v402 = vadd.f32 %v314, %v401
    %v403 = vpop.f32.mrb[0].mxu0
    %404 = vmatprep.mubr.bf16.mxu0 0
    %405 = vmatmul.mubr.bf16.gmra.mrb[0].mxu0 %v349
    %v406 = vpop.f32.mrb[0].mxu0
    %v407 = vadd.f32 %v314, %v406
    %v408 = vpop.f32.mrb[0].mxu0
    %v409 = vpop.f32.mrb[0].mxu0
    %v410 = vadd.f32 %v314, %v409
    %v411 = vpop.f32.mrb[0].mxu0
    %412 = vmatprep.mubr.bf16.mxu0 0
    %413 = vmatmul.mubr.bf16.gmra.mrb[0].mxu0 %v350
    %v414 = vpop.f32.mrb[0].mxu0
    %v415 = vadd.f32 %v314, %v414
    %v416 = vpop.f32.mrb[0].mxu0
    %v417 = vpop.f32.mrb[0].mxu0
    %v418 = vadd.f32 %v314, %v417
    %v419 = vpop.f32.mrb[0].mxu0
    %420 = vmatprep.mubr.bf16.mxu0 0
    %421 = vmatmul.mubr.bf16.gmra.mrb[0].mxu0 %v351
    %v422 = vpop.f32.mrb[0].mxu0
    %v423 = vadd.f32 %v314, %v422
    %v424 = vpop.f32.mrb[0].mxu0
    %v425 = vpop.f32.mrb[0].mxu0
    %v426 = vadd.f32 %v314, %v425
    %v427 = vpop.f32.mrb[0].mxu0
    %428 = vmatprep.mubr.bf16.mxu0 0
    %429 = vmatmul.mubr.bf16.gmra.mrb[0].mxu0 %v352
    %v430 = vpop.f32.mrb[0].mxu0
    %v431 = vadd.f32 %v314, %v430
    %v432 = vpop.f32.mrb[0].mxu0
    %v433 = vpop.f32.mrb[0].mxu0
    %v434 = vadd.f32 %v314, %v433
    %v435 = vpop.f32.mrb[0].mxu0
    %436 = vmatprep.mubr.bf16.mxu0 0
    %437 = vmatmul.mubr.bf16.gmra.mrb[0].mxu0 %v353
    %v438 = vpop.f32.mrb[0].mxu0
    %v439 = vadd.f32 %v314, %v438
    %v440 = vpop.f32.mrb[0].mxu0
    %v441 = vpop.f32.mrb[0].mxu0
    %v442 = vadd.f32 %v314, %v441
    %v443 = vpop.f32.mrb[0].mxu0
    %444 = vmatprep.mubr.bf16.mxu0 0
    %445 = vmatmul.mubr.bf16.gmra.mrb[0].mxu0 %v354
    %v446 = vpop.f32.mrb[0].mxu0
    %v447 = vadd.f32 %v314, %v446
    %v448 = vpop.f32.mrb[0].mxu0
    %v449 = vpop.f32.mrb[0].mxu0
    %v450 = vadd.f32 %v314, %v449
    %v451 = vpop.f32.mrb[0].mxu0
    %452 = vmatprep.mubr.bf16.mxu0 0
    %453 = vmatmul.mubr.bf16.gmra.mrb[0].mxu0 %v355
    %v454 = vpop.f32.mrb[0].mxu0
    %v455 = vadd.f32 %v314, %v454
    %v456 = vpop.f32.mrb[0].mxu0
    %v457 = vpop.f32.mrb[0].mxu0
    %v458 = vadd.f32 %v314, %v457
    %v459 = vpop.f32.mrb[0].mxu0
    %460 = vdwg.mxu0
    %v461 = vmax.f32 %v399, 0.0
    %v462 = vmax.f32 %v402, 0.0
    %v463 = vmax.f32 %v407, 0.0
    %v464 = vmax.f32 %v410, 0.0
    %v465 = vmax.f32 %v415, 0.0
    %v466 = vmax.f32 %v418, 0.0
    %v467 = vmax.f32 %v423, 0.0
    %v468 = vmax.f32 %v426, 0.0
    %v469 = vmax.f32 %v431, 0.0
    %v470 = vmax.f32 %v434, 0.0
    %v471 = vmax.f32 %v439, 0.0
    %v472 = vmax.f32 %v442, 0.0
    %v473 = vmax.f32 %v447, 0.0
    %v474 = vmax.f32 %v450, 0.0
    %v475 = vmax.f32 %v455, 0.0
    %v476 = vmax.f32 %v458, 0.0
    %v477 = vpack.c.bf16 %v462, %v461
    %v478 = vpack.c.bf16 %v464, %v463
    %v479 = vpack.c.bf16 %v466, %v465
    %v480 = vpack.c.bf16 %v468, %v467
    %v481 = vpack.c.bf16 %v470, %v469
    %v482 = vpack.c.bf16 %v472, %v471
    %v483 = vpack.c.bf16 %v474, %v473
    %v484 = vpack.c.bf16 %v476, %v475
    %v493 = vunpack.c.l.b16 %v477
    %v494 = vunpack.c.h.b16 %v477
    %v495 = vunpack.c.l.b16 %v478
    %v496 = vunpack.c.h.b16 %v478
    %v497 = vunpack.c.l.b16 %v479
    %v498 = vunpack.c.h.b16 %v479
    %v499 = vunpack.c.l.b16 %v480
    %v500 = vunpack.c.h.b16 %v480
    %v501 = vunpack.c.l.b16 %v481
    %v502 = vunpack.c.h.b16 %v481
    %v503 = vunpack.c.l.b16 %v482
    %v504 = vunpack.c.h.b16 %v482
    %v505 = vunpack.c.l.b16 %v483
    %v506 = vunpack.c.h.b16 %v483
    %v507 = vunpack.c.l.b16 %v484
    %v508 = vunpack.c.h.b16 %v484
    %v509 = vpack.c.b16 %v493, %v493
    %v510 = vpack.c.b16 %v494, %v494
    %v511 = vpack.c.b16 %v495, %v495
    %v512 = vpack.c.b16 %v496, %v496
    %v513 = vpack.c.b16 %v497, %v497
    %v514 = vpack.c.b16 %v498, %v498
    %v515 = vpack.c.b16 %v499, %v499
    %v516 = vpack.c.b16 %v500, %v500
    %v517 = vpack.c.b16 %v501, %v501
    %v518 = vpack.c.b16 %v502, %v502
    %v519 = vpack.c.b16 %v503, %v503
    %v520 = vpack.c.b16 %v504, %v504
    %v521 = vpack.c.b16 %v505, %v505
    %v522 = vpack.c.b16 %v506, %v506
    %v523 = vpack.c.b16 %v507, %v507
    %v524 = vpack.c.b16 %v508, %v508
    %541 = vst [vmem:[#allocation8] sm:$0xf] %v509
    %542 = vst [vmem:[#allocation8 + $0x4] sm:$0xf] %v510
    %543 = vst [vmem:[#allocation8 + $0x8] sm:$0xf] %v511
    %544 = vst [vmem:[#allocation8 + $0xc] sm:$0xf] %v512
    %545 = vst [vmem:[#allocation8 + $0x10] sm:$0xf] %v513
    %546 = vst [vmem:[#allocation8 + $0x14] sm:$0xf] %v514
    %547 = vst [vmem:[#allocation8 + $0x18] sm:$0xf] %v515
    %548 = vst [vmem:[#allocation8 + $0x1c] sm:$0xf] %v516
    %549 = vst [vmem:[#allocation8 + $0x20] sm:$0xf] %v517
    %550 = vst [vmem:[#allocation8 + $0x24] sm:$0xf] %v518
    %551 = vst [vmem:[#allocation8 + $0x28] sm:$0xf] %v519
    %552 = vst [vmem:[#allocation8 + $0x2c] sm:$0xf] %v520
    %553 = vst [vmem:[#allocation8 + $0x30] sm:$0xf] %v521
    %554 = vst [vmem:[#allocation8 + $0x34] sm:$0xf] %v522
    %555 = vst [vmem:[#allocation8 + $0x38] sm:$0xf] %v523
    %556 = vst [vmem:[#allocation8 + $0x3c] sm:$0xf] %v524
    // Predicated region
    $region30: #{tpu_custom_call.1} parent=1 // pred_check
      _
    $region31: #{tpu_custom_call.1} parent=1 // pred_check_branch
      %558 = sbr.rel (0) target = $region33
    $region32: #{tpu_custom_call.1} parent=1 // pred_region
      %s560 = ssub.s32 1024, 1024
      %561 = vsyncadd [#allocation4], %s560
      %s562 = sshll.u32 [#allocation8], 4
      %s563 = int_to_ptr.vmem [resolvable:$true] %s562
      %568 = dma.vmem_to_hbm [thread:$0]  %s563, 1024, %s4, [#allocation4], 64, 64, 4
    $region33: #{tpu_custom_call.1} parent=1 // pred_fallthru
      _
    // Predicated region
    $region34: #{tpu_custom_call.1} parent=1 // pred_check
      _
    $region35: #{tpu_custom_call.1} parent=1 // pred_check_branch
      %570 = sbr.rel (0) target = $region37
    $region36: #{tpu_custom_call.1} parent=1 // pred_region
      %571 = dma.done [#allocation4], 1024
    $region37: #{tpu_custom_call.1} parent=1 // pred_fallthru
      _
    %572 = vsyncpa [#allocation3], 1
    %573 = vsyncpa [#allocation6], 1
    %574 = vsyncpa [#allocation4], 1

</llo_original>
